<compile_context>
chip_gen: v7x
topology: tpu7x:2x2x1
jax: 0.10.0
libtpu: 0.0.40
codegen_flags: <defaults>
</compile_context>

<pallas_src>
import functools

import jax
import jax.numpy as jnp
import numpy as np
from jax.experimental import pallas as pl
from jax.experimental.pallas import tpu as pltpu


# ----------------------------- helpers ---------------------------------------

def _pair(v):
    if isinstance(v, (tuple, list)):
        assert len(v) == 2
        return int(v[0]), int(v[1])
    return int(v), int(v)


def _pool_out_size(in_size, k, s, d):
    """PyTorch MaxPool2d output size with padding=0, ceil_mode=True."""
    eff_k = d * (k - 1) + 1
    out = -(-(in_size - eff_k) // s) + 1          # ceil((in - eff_k) / s) + 1
    if (out - 1) * s >= in_size:                  # last window must start inside input
        out -= 1
    return out


def _padded_vmem_bytes(shape, dtype):
    """VMEM footprint of a buffer: last dim padded to 128 lanes, second-to-last
    to the dtype's sublane packing (8 for 32-bit, 16 for 16-bit, 32 for 8-bit)."""
    itemsize = jnp.dtype(dtype).itemsize
    sub = 8 * max(1, 4 // itemsize)
    lanes = -(-int(shape[-1]) // 128) * 128
    subl = -(-int(shape[-2]) // sub) * sub
    lead = 1
    for d in shape[:-2]:
        lead *= int(d)
    return lead * subl * lanes * itemsize


def _tree_max(vals):
    """Pairwise (log-depth) max reduction of a non-empty list of arrays."""
    vals = list(vals)
    while len(vals) > 1:
        nxt = [jnp.maximum(vals[i], vals[i + 1]) for i in range(0, len(vals) - 1, 2)]
        if len(vals) % 2:
            nxt.append(vals[-1])
        vals = nxt
    return vals[0]


# ----------------------------- kernel -----------------------------------------

def _dilated_maxpool_kernel(x_ref, o_ref, cm_ref, *, kh, kw, sh, sw, dh, dw,
                            H, W, H_out, W_out, H_p, Hs, flatten_out):
    sdtype = cm_ref.dtype
    tn = x_ref.shape[0]
    if jnp.issubdtype(sdtype, jnp.floating):
        neg = float("-inf")                        # skipped taps behave like true skips
    else:
        neg = int(jnp.iinfo(sdtype).min)

    # ---- border rows of the padded frame (only 2*dh + extra_h rows) ---------
    # Zero-pad rows contribute 0 (module's explicit pad); rows beyond the
    # padded input (ceil-mode overhang) contribute -inf, i.e. are skipped.
    if dh > 0:
        zrows = jnp.zeros((tn, dh, W_out), sdtype)
        cm_ref[:, 0:dh, :] = zrows
        cm_ref[:, dh + H:H_p, :] = zrows
    if Hs > H_p:
        cm_ref[:, H_p:Hs, :] = jnp.full((tn, Hs - H_p, W_out), neg, sdtype)

    # ---- phase 1: column (W) taps -> scratch interior ------------------------
    def col_slice(c0, width):
        if sw == 1:
            return slice(c0, c0 + width)
        return pl.ds(c0, width, sw)

    full_taps, partial_taps = [], []
    for j in range(kw):
        c0 = j * dw
        if c0 >= W:
            continue                               # tap never inside the input
        n_valid = min(W_out, (W - 1 - c0) // sw + 1)
        if n_valid == W_out:
            full_taps.append(c0)
        elif n_valid > 0:
            partial_taps.append((c0, n_valid))

    cm = _tree_max([x_ref[:, :, col_slice(c0, W_out)].astype(sdtype)
                    for c0 in full_taps])          # tap j=0 is always full-width
    cm_ref[:, dh:dh + H, :] = cm
    for c0, n_valid in partial_taps:               # only when ceil mode overhangs W
        v = x_ref[:, :, col_slice(c0, n_valid)].astype(sdtype)
        cm_ref[:, dh:dh + H, 0:n_valid] = jnp.maximum(
            cm_ref[:, dh:dh + H, 0:n_valid], v)

    # ---- phase 2: row (H) taps from the padded scratch ------------------------
    row_taps = []
    for i in range(kh):
        r0 = i * dh
        if sh == 1:
            sl = slice(r0, r0 + H_out)
        else:
            sl = pl.ds(r0, H_out, sh)              # sublane-strided read
        row_taps.append(cm_ref[:, sl, :])
    out3 = _tree_max(row_taps)

    if flatten_out:
        # Lane-dense store: relayout (H_out, W_out) -> H_out*W_out lanes.
        o_ref[...] = out3.reshape(tn, H_out * W_out).astype(o_ref.dtype)
    else:
        o_ref[...] = out3.astype(o_ref.dtype)


# ----------------------------- wrapper ----------------------------------------

def dilated_maxpool2d(x, kernel_size, stride, dilation):
    kh, kw = _pair(kernel_size)
    sh, sw = _pair(stride)
    dh, dw = _pair(dilation)
    B, C, H, W = x.shape

    H_p = H + 2 * dh                               # module's explicit zero pad along H
    H_out = _pool_out_size(H_p, kh, sh, dh)
    W_out = _pool_out_size(W, kw, sw, dw)
    assert H_out >= 1 and W_out >= 1, "pooling window larger than padded input"
    extra_h = max(0, (H_out - 1) * sh + (kh - 1) * dh + 1 - H_p)
    Hs = H_p + extra_h                             # padded-row extent of the scratch

    N = B * C
    xr = x.reshape(N, H, W)

    # Scratch dtype: widen sub-32-bit dtypes so sublane-offset slicing stays
    # cheap (no packed-row unpack/roll) and max stays exact.
    xdt = jnp.dtype(x.dtype)
    if jnp.issubdtype(xdt, jnp.floating):
        sdtype = xdt if xdt.itemsize >= 4 else jnp.dtype(jnp.float32)
    else:
        sdtype = xdt if xdt.itemsize >= 4 else jnp.dtype(jnp.int32)

    # --- tile the fused batch*channel axis using (8,128)-padded footprints ----
    in1 = _padded_vmem_bytes((1, H, W), xdt)
    out1 = _padded_vmem_bytes((1, H_out, W_out), xdt)
    scr1 = _padded_vmem_bytes((1, Hs, W_out), sdtype)
    per_n = 2 * in1 + 2 * out1 + scr1              # double-buffered in/out + scratch

    budget = 24 << 20                              # fits v7x's 64 MiB with headroom
    tn_vmem = max(1, budget // per_n)
    tn_steps = -(-N // 4) if N >= 4 else N         # >= 4 grid steps (2 per TC) if possible
    tn = max(1, min(N, tn_vmem, tn_steps))

    # The flattened-output variant makes N the sublane axis of the 2-D output
    # block, so its leading block dim must be a multiple of 8 (or the full N).
    flatten = W_out < 128
    if N <= 8:
        tn_f = N
        flatten = flatten and tn_vmem >= N
    elif tn_vmem >= 8:
        tn_f = max(8, (min(N, tn_vmem, max(8, tn_steps)) // 8) * 8)
    else:
        flatten = False
        tn_f = tn

    def build_and_run(flatten_out, tn_blk):
        grid = (pl.cdiv(N, tn_blk),)               # ragged last block is fine: planes
        total = tn_blk * per_n                     # are independent, tail is masked.
        vmem_limit = int(min(96 << 20, max(32 << 20, int(total * 1.4) + (2 << 20))))
        kern = functools.partial(
            _dilated_maxpool_kernel,
            kh=kh, kw=kw, sh=sh, sw=sw, dh=dh, dw=dw,
            H=H, W=W, H_out=H_out, W_out=W_out, H_p=H_p, Hs=Hs,
            flatten_out=flatten_out)
        if flatten_out:
            out_shape = jax.ShapeDtypeStruct((N, H_out * W_out), x.dtype)
            out_spec = pl.BlockSpec((tn_blk, H_out * W_out), lambda i: (i, 0))
        else:
            out_shape = jax.ShapeDtypeStruct((N, H_out, W_out), x.dtype)
            out_spec = pl.BlockSpec((tn_blk, H_out, W_out), lambda i: (i, 0, 0))
        return pl.pallas_call(
            kern,
            out_shape=out_shape,
            grid_spec=pltpu.PrefetchScalarGridSpec(
                num_scalar_prefetch=0,
                grid=grid,
                in_specs=[pl.BlockSpec((tn_blk, H, W), lambda i: (i, 0, 0))],
                out_specs=out_spec,
                scratch_shapes=[pltpu.VMEM((tn_blk, Hs, W_out), sdtype)]),
            compiler_params=pltpu.CompilerParams(
                dimension_semantics=("parallel",),
                vmem_limit_bytes=vmem_limit),
        )(xr)

    if flatten:
        try:
            y = build_and_run(True, tn_f)
            return y.reshape(B, C, H_out, W_out)   # free metadata reshape
        except Exception:
            # Mosaic on some versions rejects the in-kernel (H_out, W_out) ->
            # H_out*W_out relayout; fall back to the always-supported 3-D store.
            # (This eager-mode fallback is how the module is used in this script.)
            pass
    y = build_and_run(False, tn)
    return y.reshape(B, C, H_out, W_out)


class DilatedMaxPool2d:
    """JAX/Pallas equivalent of the PyTorch DilatedMaxPool2d module."""

    def __init__(self, kernel_size, stride, dilation):
        self.kernel_size = _pair(kernel_size)
        self.stride = _pair(stride)
        self.dilation = _pair(dilation)

    def __call__(self, x):
        return dilated_maxpool2d(x, self.kernel_size, self.stride, self.dilation)


# ----------------------------- reference (numpy) -------------------------------

def _reference_np(x, kernel_size, stride, dilation):
    kh, kw = _pair(kernel_size)
    sh, sw = _pair(stride)
    dh, dw = _pair(dilation)
    xn = np.asarray(x, dtype=np.float64)
    B, C, H, W = xn.shape
    xp = np.zeros((B, C, H + 2 * dh, W), dtype=np.float64)
    xp[:, :, dh:dh + H, :] = xn
    H_p, W_p = xp.shape[2], xp.shape[3]
    H_out = _pool_out_size(H_p, kh, sh, dh)
    W_out = _pool_out_size(W_p, kw, sw, dw)
    out = np.full((B, C, H_out, W_out), -np.inf, dtype=np.float64)
    for oh in range(H_out):
        for ow in range(W_out):
            for i in range(kh):
                for j in range(kw):
                    r, c = oh * sh + i * dh, ow * sw + j * dw
                    if r < H_p and c < W_p:        # ceil-mode: OOB taps skipped
                        out[:, :, oh, ow] = np.maximum(out[:, :, oh, ow],
                                                       xp[:, :, r, c])
    return out.astype(np.asarray(x).dtype)


# --------------------------------- main ----------------------------------------

if __name__ == "__main__":
    k1, k2 = jax.random.split(jax.random.PRNGKey(0))
    kernel_size, stride, dilation = (3, 3), (1, 1), (2, 1)
    module = DilatedMaxPool2d(kernel_size, stride, dilation)

    # Primary case: time-preserving pooling (kh=3, sh=1, dilation_h=2), NCHW.
    x = jax.random.normal(k1, (2, 4, 16, 16), dtype=jnp.float32)
    y = jax.block_until_ready(module(x))
    ref = _reference_np(np.asarray(x), kernel_size, stride, dilation)
    assert y.shape == ref.shape, (y.shape, ref.shape)
    assert y.dtype == x.dtype
    assert np.allclose(np.asarray(y), ref, atol=1e-6, rtol=1e-6), "pool mismatch"

    # Ragged-tail case: B*C = 10 is not divisible by the chosen N-block size.
    x2 = jax.random.normal(k2, (2, 5, 16, 16), dtype=jnp.float32)
    y2 = jax.block_until_ready(module(x2))
    ref2 = _reference_np(np.asarray(x2), kernel_size, stride, dilation)
    assert y2.shape == ref2.shape, (y2.shape, ref2.shape)
    assert np.allclose(np.asarray(y2), ref2, atol=1e-6, rtol=1e-6), "pool mismatch (ragged)"

    print("KERNEL_OK")
</pallas_src>

<mosaic_0001>
module attributes {stable_mosaic.version = 11 : i64} {
  func.func @_dilated_maxpool_kernel(%arg0: i32, %arg1: memref<8x16x16xf32, #tpu.memory_space<vmem>>, %arg2: memref<8x224xf32, #tpu.memory_space<vmem>>, %arg3: memref<8x20x14xf32, #tpu.memory_space<vmem>>) attributes {dimension_semantics = [#tpu.dimension_semantics<parallel>], iteration_bounds = array<i64: 1>, scalar_prefetch = 0 : i64, scratch_operands = 1 : i64, tpu.core_type = #tpu.core_type<tc>, window_params = [{transform_indices = @transform_0, window_bounds = array<i64: 8, 16, 16>}, {transform_indices = @transform_1, window_bounds = array<i64: 8, 224>}]} {
    %cst = arith.constant 0.000000e+00 : f32
    %0 = vector.broadcast %cst : f32 to vector<8x2x14xf32>
    %c0 = arith.constant 0 : index
    %c0_0 = arith.constant 0 : index
    %c0_1 = arith.constant 0 : index
    %1 = vector.load %arg3[%c0, %c0_0, %c0_1] : memref<8x20x14xf32, #tpu.memory_space<vmem>>, vector<8x2x14xf32>
    tpu.vector_store %arg3[%c0, %c0_0, %c0_1], %0 {strides = array<i32>} : memref<8x20x14xf32, #tpu.memory_space<vmem>>, vector<8x2x14xf32>,
    %c0_2 = arith.constant 0 : index
    %c18 = arith.constant 18 : index
    %c0_3 = arith.constant 0 : index
    %2 = vector.load %arg3[%c0_2, %c18, %c0_3] : memref<8x20x14xf32, #tpu.memory_space<vmem>>, vector<8x2x14xf32>
    tpu.vector_store %arg3[%c0_2, %c18, %c0_3], %0 {strides = array<i32>} : memref<8x20x14xf32, #tpu.memory_space<vmem>>, vector<8x2x14xf32>,
    %c0_4 = arith.constant 0 : index
    %c0_5 = arith.constant 0 : index
    %c0_6 = arith.constant 0 : index
    %3 = vector.load %arg1[%c0_4, %c0_5, %c0_6] : memref<8x16x16xf32, #tpu.memory_space<vmem>>, vector<8x16x14xf32>
    %c0_7 = arith.constant 0 : index
    %c0_8 = arith.constant 0 : index
    %c1 = arith.constant 1 : index
    %4 = vector.load %arg1[%c0_7, %c0_8, %c1] : memref<8x16x16xf32, #tpu.memory_space<vmem>>, vector<8x16x14xf32>
    %c0_9 = arith.constant 0 : index
    %c0_10 = arith.constant 0 : index
    %c2 = arith.constant 2 : index
    %5 = vector.load %arg1[%c0_9, %c0_10, %c2] : memref<8x16x16xf32, #tpu.memory_space<vmem>>, vector<8x16x14xf32>
    %6 = arith.maximumf %3, %4 : vector<8x16x14xf32>
    %7 = arith.maximumf %6, %5 : vector<8x16x14xf32>
    %c0_11 = arith.constant 0 : index
    %c2_12 = arith.constant 2 : index
    %c0_13 = arith.constant 0 : index
    %8 = vector.load %arg3[%c0_11, %c2_12, %c0_13] : memref<8x20x14xf32, #tpu.memory_space<vmem>>, vector<8x16x14xf32>
    tpu.vector_store %arg3[%c0_11, %c2_12, %c0_13], %7 {strides = array<i32>} : memref<8x20x14xf32, #tpu.memory_space<vmem>>, vector<8x16x14xf32>,
    %c0_14 = arith.constant 0 : index
    %c0_15 = arith.constant 0 : index
    %c0_16 = arith.constant 0 : index
    %9 = vector.load %arg3[%c0_14, %c0_15, %c0_16] : memref<8x20x14xf32, #tpu.memory_space<vmem>>, vector<8x16x14xf32>
    %c0_17 = arith.constant 0 : index
    %c2_18 = arith.constant 2 : index
    %c0_19 = arith.constant 0 : index
    %10 = vector.load %arg3[%c0_17, %c2_18, %c0_19] : memref<8x20x14xf32, #tpu.memory_space<vmem>>, vector<8x16x14xf32>
    %c0_20 = arith.constant 0 : index
    %c4 = arith.constant 4 : index
    %c0_21 = arith.constant 0 : index
    %11 = vector.load %arg3[%c0_20, %c4, %c0_21] : memref<8x20x14xf32, #tpu.memory_space<vmem>>, vector<8x16x14xf32>
    %12 = arith.maximumf %9, %10 : vector<8x16x14xf32>
    %13 = arith.maximumf %12, %11 : vector<8x16x14xf32>
    %14 = vector.shape_cast %13 : vector<8x16x14xf32> to vector<8x224xf32>
    %c0_22 = arith.constant 0 : index
    %c0_23 = arith.constant 0 : index
    %15 = vector.load %arg2[%c0_22, %c0_23] : memref<8x224xf32, #tpu.memory_space<vmem>>, vector<8x224xf32>
    tpu.vector_store %arg2[%c0_22, %c0_23], %14 {strides = array<i32>} : memref<8x224xf32, #tpu.memory_space<vmem>>, vector<8x224xf32>,
    return
  }
  func.func @transform_0(%arg0: i32) -> (i32, i32, i32) {
    %c0_i32 = arith.constant 0 : i32
    %c0_i32_0 = arith.constant 0 : i32
    %c0_i32_1 = arith.constant 0 : i32
    return %arg0, %c0_i32, %c0_i32_0 : i32, i32, i32
  }
  func.func @transform_1(%arg0: i32) -> (i32, i32) {
    %c0_i32 = arith.constant 0 : i32
    %c0_i32_0 = arith.constant 0 : i32
    return %arg0, %c0_i32 : i32, i32
  }
}

module attributes {stable_mosaic.version = 11 : i64} {
  func.func @_dilated_maxpool_kernel(%arg0: i32, %arg1: memref<2x16x16xf32, #tpu.memory_space<vmem>>, %arg2: memref<2x16x14xf32, #tpu.memory_space<vmem>>, %arg3: memref<2x20x14xf32, #tpu.memory_space<vmem>>) attributes {dimension_semantics = [#tpu.dimension_semantics<parallel>], iteration_bounds = array<i64: 4>, scalar_prefetch = 0 : i64, scratch_operands = 1 : i64, tpu.core_type = #tpu.core_type<tc>, window_params = [{transform_indices = @transform_0, window_bounds = array<i64: 2, 16, 16>}, {transform_indices = @transform_1, window_bounds = array<i64: 2, 16, 14>}]} {
    %cst = arith.constant 0.000000e+00 : f32
    %0 = vector.broadcast %cst : f32 to vector<2x2x14xf32>
    %c0 = arith.constant 0 : index
    %c0_0 = arith.constant 0 : index
    %c0_1 = arith.constant 0 : index
    %1 = vector.load %arg3[%c0, %c0_0, %c0_1] : memref<2x20x14xf32, #tpu.memory_space<vmem>>, vector<2x2x14xf32>
    tpu.vector_store %arg3[%c0, %c0_0, %c0_1], %0 {strides = array<i32>} : memref<2x20x14xf32, #tpu.memory_space<vmem>>, vector<2x2x14xf32>,
    %c0_2 = arith.constant 0 : index
    %c18 = arith.constant 18 : index
    %c0_3 = arith.constant 0 : index
    %2 = vector.load %arg3[%c0_2, %c18, %c0_3] : memref<2x20x14xf32, #tpu.memory_space<vmem>>, vector<2x2x14xf32>
    tpu.vector_store %arg3[%c0_2, %c18, %c0_3], %0 {strides = array<i32>} : memref<2x20x14xf32, #tpu.memory_space<vmem>>, vector<2x2x14xf32>,
    %c0_4 = arith.constant 0 : index
    %c0_5 = arith.constant 0 : index
    %c0_6 = arith.constant 0 : index
    %3 = vector.load %arg1[%c0_4, %c0_5, %c0_6] : memref<2x16x16xf32, #tpu.memory_space<vmem>>, vector<2x16x14xf32>
    %c0_7 = arith.constant 0 : index
    %c0_8 = arith.constant 0 : index
    %c1 = arith.constant 1 : index
    %4 = vector.load %arg1[%c0_7, %c0_8, %c1] : memref<2x16x16xf32, #tpu.memory_space<vmem>>, vector<2x16x14xf32>
    %c0_9 = arith.constant 0 : index
    %c0_10 = arith.constant 0 : index
    %c2 = arith.constant 2 : index
    %5 = vector.load %arg1[%c0_9, %c0_10, %c2] : memref<2x16x16xf32, #tpu.memory_space<vmem>>, vector<2x16x14xf32>
    %6 = arith.maximumf %3, %4 : vector<2x16x14xf32>
    %7 = arith.maximumf %6, %5 : vector<2x16x14xf32>
    %c0_11 = arith.constant 0 : index
    %c2_12 = arith.constant 2 : index
    %c0_13 = arith.constant 0 : index
    %8 = vector.load %arg3[%c0_11, %c2_12, %c0_13] : memref<2x20x14xf32, #tpu.memory_space<vmem>>, vector<2x16x14xf32>
    tpu.vector_store %arg3[%c0_11, %c2_12, %c0_13], %7 {strides = array<i32>} : memref<2x20x14xf32, #tpu.memory_space<vmem>>, vector<2x16x14xf32>,
    %c0_14 = arith.constant 0 : index
    %c0_15 = arith.constant 0 : index
    %c0_16 = arith.constant 0 : index
    %9 = vector.load %arg3[%c0_14, %c0_15, %c0_16] : memref<2x20x14xf32, #tpu.memory_space<vmem>>, vector<2x16x14xf32>
    %c0_17 = arith.constant 0 : index
    %c2_18 = arith.constant 2 : index
    %c0_19 = arith.constant 0 : index
    %10 = vector.load %arg3[%c0_17, %c2_18, %c0_19] : memref<2x20x14xf32, #tpu.memory_space<vmem>>, vector<2x16x14xf32>
    %c0_20 = arith.constant 0 : index
    %c4 = arith.constant 4 : index
    %c0_21 = arith.constant 0 : index
    %11 = vector.load %arg3[%c0_20, %c4, %c0_21] : memref<2x20x14xf32, #tpu.memory_space<vmem>>, vector<2x16x14xf32>
    %12 = arith.maximumf %9, %10 : vector<2x16x14xf32>
    %13 = arith.maximumf %12, %11 : vector<2x16x14xf32>
    %c0_22 = arith.constant 0 : index
    %c0_23 = arith.constant 0 : index
    %c0_24 = arith.constant 0 : index
    %14 = vector.load %arg2[%c0_22, %c0_23, %c0_24] : memref<2x16x14xf32, #tpu.memory_space<vmem>>, vector<2x16x14xf32>
    tpu.vector_store %arg2[%c0_22, %c0_23, %c0_24], %13 {strides = array<i32>} : memref<2x16x14xf32, #tpu.memory_space<vmem>>, vector<2x16x14xf32>,
    return
  }
  func.func @transform_0(%arg0: i32) -> (i32, i32, i32) {
    %c0_i32 = arith.constant 0 : i32
    %c0_i32_0 = arith.constant 0 : i32
    %c0_i32_1 = arith.constant 0 : i32
    return %arg0, %c0_i32, %c0_i32_0 : i32, i32, i32
  }
  func.func @transform_1(%arg0: i32) -> (i32, i32, i32) {
    %c0_i32 = arith.constant 0 : i32
    %c0_i32_0 = arith.constant 0 : i32
    %c0_i32_1 = arith.constant 0 : i32
    return %arg0, %c0_i32, %c0_i32_0 : i32, i32, i32
  }
}

</mosaic_0001>

<llo_original>
// kernel: tpu_custom_call.1
$region0: #{tpu_custom_call.1}
  #allocation0 [shape = 'u32[]', space=smem, size = 0x4, offset = 0x4, fixed_abs, tag = 'smem constant byte address 0x4 - core index']
  #allocation1 [shape = 'u32[144,128]{1,0:T(1,128)}', space=vmem, size = 0x12000, scoped, tag = 'internal scratch']
  #allocation2 [shape = 'f32[8,20,14]{2,1,0:T(8,128)}', space=vmem, size = 0x18000, scoped, tag = 'scratch operand']
  %s0 = inlined_call_operand.hbm [shape: f32[8,16,16], index: 0, kind: input, shape index: {}]
  %s1 = inlined_call_operand.hbm [shape: f32[8,224], index: 1, kind: output, shape index: {}]
  %s2 = sld [smem:[#allocation0]]
  $region18: #{tpu_custom_call.1} parent=0
    _
  %s4 = ssub.s32 1, %s2
  %s5 = scalar_select 0, %s4, %s2
  $region1: #{tpu_custom_call.1} parent=0
    #allocation3 [shape = 'u8[65536]{0}', space=vmem, size = 0x10000, scoped, tag = 'input window, operand 0, single buffered']
    #allocation4 [shape = 's32[1]{0}', space=sflag, size = 0x4, scoped, tag = 'scoped memory for tpu_custom_call.1']
    #allocation5 [shape = 's32[1]{0}', space=sflag, size = 0x4, scoped, tag = 'scoped memory for tpu_custom_call.1']
    #allocation6 [shape = 'u8[8192]{0}', space=vmem, size = 0x2000, scoped, tag = 'output window, operand 0, single buffered']
    %6 = vsyncpa [#allocation4], 0
    %7 = vsyncpa [#allocation5], 0
    // Predicated region
    $region2: #{tpu_custom_call.1} parent=1 // pred_check
      _
    $region3: #{tpu_custom_call.1} parent=1 // pred_check_branch
      %9 = sbr.rel (0) target = $region5
    $region4: #{tpu_custom_call.1} parent=1 // pred_region
      %s11 = ssub.s32 2048, 2048
      %12 = vsyncadd [#allocation4], %s11
      %s13 = sshll.u32 [#allocation3], 4
      %s14 = int_to_ptr.vmem [resolvable:$true] %s13
      %19 = dma.hbm_to_vmem [thread:$0]  %s0, 2048, %s14, [#allocation4], 128, 128, 8
    $region5: #{tpu_custom_call.1} parent=1 // pred_fallthru
      _
    // Predicated region
    $region6: #{tpu_custom_call.1} parent=1 // pred_check
      _
    $region7: #{tpu_custom_call.1} parent=1 // pred_check_branch
      %21 = sbr.rel (0) target = $region9
    $region8: #{tpu_custom_call.1} parent=1 // pred_region
      %22 = dma.done [#allocation4], 2048
    $region9: #{tpu_custom_call.1} parent=1 // pred_fallthru
      _
    %vm23 = vcmask 107520
    %24 = vst.msk [vmem:[#allocation2] sm:$0x3] %vm23, 0.0
    %25 = vst.msk [vmem:[#allocation2 + $0x18] sm:$0x3] %vm23, 0.0
    %26 = vst.msk [vmem:[#allocation2 + $0x30] sm:$0x3] %vm23, 0.0
    %27 = vst.msk [vmem:[#allocation2 + $0x48] sm:$0x3] %vm23, 0.0
    %28 = vst.msk [vmem:[#allocation2 + $0x60] sm:$0x3] %vm23, 0.0
    %29 = vst.msk [vmem:[#allocation2 + $0x78] sm:$0x3] %vm23, 0.0
    %30 = vst.msk [vmem:[#allocation2 + $0x90] sm:$0x3] %vm23, 0.0
    %31 = vst.msk [vmem:[#allocation2 + $0xa8] sm:$0x3] %vm23, 0.0
    %32 = vst.msk [vmem:[#allocation2 + $0x12] sm:$0x3] %vm23, 0.0
    %33 = vst.msk [vmem:[#allocation2 + $0x2a] sm:$0x3] %vm23, 0.0
    %34 = vst.msk [vmem:[#allocation2 + $0x42] sm:$0x3] %vm23, 0.0
    %35 = vst.msk [vmem:[#allocation2 + $0x5a] sm:$0x3] %vm23, 0.0
    %36 = vst.msk [vmem:[#allocation2 + $0x72] sm:$0x3] %vm23, 0.0
    %37 = vst.msk [vmem:[#allocation2 + $0x8a] sm:$0x3] %vm23, 0.0
    %38 = vst.msk [vmem:[#allocation2 + $0xa2] sm:$0x3] %vm23, 0.0
    %39 = vst.msk [vmem:[#allocation2 + $0xba] sm:$0x3] %vm23, 0.0
    %v40 = vld [vmem:[#allocation3] sm:$0xff]
    %v41 = vld [vmem:[#allocation3 + $0x8] sm:$0xff]
    %v42 = vld [vmem:[#allocation3 + $0x10] sm:$0xff]
    %v43 = vld [vmem:[#allocation3 + $0x18] sm:$0xff]
    %v44 = vld [vmem:[#allocation3 + $0x20] sm:$0xff]
    %v45 = vld [vmem:[#allocation3 + $0x28] sm:$0xff]
    %v46 = vld [vmem:[#allocation3 + $0x30] sm:$0xff]
    %v47 = vld [vmem:[#allocation3 + $0x38] sm:$0xff]
    %v48 = vld [vmem:[#allocation3 + $0x40] sm:$0xff]
    %v49 = vld [vmem:[#allocation3 + $0x48] sm:$0xff]
    %v50 = vld [vmem:[#allocation3 + $0x50] sm:$0xff]
    %v51 = vld [vmem:[#allocation3 + $0x58] sm:$0xff]
    %v52 = vld [vmem:[#allocation3 + $0x60] sm:$0xff]
    %v53 = vld [vmem:[#allocation3 + $0x68] sm:$0xff]
    %v54 = vld [vmem:[#allocation3 + $0x70] sm:$0xff]
    %v55 = vld [vmem:[#allocation3 + $0x78] sm:$0xff]
    %72 = vrot.lane.b32.xlu0 %v40, 127
    %v73 = vpop.permute.xlu0 %72
    %74 = vrot.lane.b32.xlu0 %v41, 127
    %v75 = vpop.permute.xlu0 %74
    %76 = vrot.lane.b32.xlu0 %v42, 127
    %v77 = vpop.permute.xlu0 %76
    %78 = vrot.lane.b32.xlu0 %v43, 127
    %v79 = vpop.permute.xlu0 %78
    %80 = vrot.lane.b32.xlu0 %v44, 127
    %v81 = vpop.permute.xlu0 %80
    %82 = vrot.lane.b32.xlu0 %v45, 127
    %v83 = vpop.permute.xlu0 %82
    %84 = vrot.lane.b32.xlu0 %v46, 127
    %v85 = vpop.permute.xlu0 %84
    %86 = vrot.lane.b32.xlu0 %v47, 127
    %v87 = vpop.permute.xlu0 %86
    %88 = vrot.lane.b32.xlu0 %v48, 127
    %v89 = vpop.permute.xlu0 %88
    %90 = vrot.lane.b32.xlu0 %v49, 127
    %v91 = vpop.permute.xlu0 %90
    %92 = vrot.lane.b32.xlu0 %v50, 127
    %v93 = vpop.permute.xlu0 %92
    %94 = vrot.lane.b32.xlu0 %v51, 127
    %v95 = vpop.permute.xlu0 %94
    %96 = vrot.lane.b32.xlu0 %v52, 127
    %v97 = vpop.permute.xlu0 %96
    %98 = vrot.lane.b32.xlu0 %v53, 127
    %v99 = vpop.permute.xlu0 %98
    %100 = vrot.lane.b32.xlu0 %v54, 127
    %v101 = vpop.permute.xlu0 %100
    %102 = vrot.lane.b32.xlu0 %v55, 127
    %v103 = vpop.permute.xlu0 %102
    %v120 = vmax.f32 %v40, %v73
    %v121 = vmax.f32 %v41, %v75
    %v122 = vmax.f32 %v42, %v77
    %v123 = vmax.f32 %v43, %v79
    %v124 = vmax.f32 %v44, %v81
    %v125 = vmax.f32 %v45, %v83
    %v126 = vmax.f32 %v46, %v85
    %v127 = vmax.f32 %v47, %v87
    %v128 = vmax.f32 %v48, %v89
    %v129 = vmax.f32 %v49, %v91
    %v130 = vmax.f32 %v50, %v93
    %v131 = vmax.f32 %v51, %v95
    %v132 = vmax.f32 %v52, %v97
    %v133 = vmax.f32 %v53, %v99
    %v134 = vmax.f32 %v54, %v101
    %v135 = vmax.f32 %v55, %v103
    %136 = vrot.lane.b32.xlu0 %v40, 126
    %v137 = vpop.permute.xlu0 %136
    %138 = vrot.lane.b32.xlu0 %v41, 126
    %v139 = vpop.permute.xlu0 %138
    %140 = vrot.lane.b32.xlu0 %v42, 126
    %v141 = vpop.permute.xlu0 %140
    %142 = vrot.lane.b32.xlu0 %v43, 126
    %v143 = vpop.permute.xlu0 %142
    %144 = vrot.lane.b32.xlu0 %v44, 126
    %v145 = vpop.permute.xlu0 %144
    %146 = vrot.lane.b32.xlu0 %v45, 126
    %v147 = vpop.permute.xlu0 %146
    %148 = vrot.lane.b32.xlu0 %v46, 126
    %v149 = vpop.permute.xlu0 %148
    %150 = vrot.lane.b32.xlu0 %v47, 126
    %v151 = vpop.permute.xlu0 %150
    %152 = vrot.lane.b32.xlu0 %v48, 126
    %v153 = vpop.permute.xlu0 %152
    %154 = vrot.lane.b32.xlu0 %v49, 126
    %v155 = vpop.permute.xlu0 %154
    %156 = vrot.lane.b32.xlu0 %v50, 126
    %v157 = vpop.permute.xlu0 %156
    %158 = vrot.lane.b32.xlu0 %v51, 126
    %v159 = vpop.permute.xlu0 %158
    %160 = vrot.lane.b32.xlu0 %v52, 126
    %v161 = vpop.permute.xlu0 %160
    %162 = vrot.lane.b32.xlu0 %v53, 126
    %v163 = vpop.permute.xlu0 %162
    %164 = vrot.lane.b32.xlu0 %v54, 126
    %v165 = vpop.permute.xlu0 %164
    %166 = vrot.lane.b32.xlu0 %v55, 126
    %v167 = vpop.permute.xlu0 %166
    %v184 = vmax.f32 %v120, %v137
    %v185 = vmax.f32 %v121, %v139
    %v186 = vmax.f32 %v122, %v141
    %v187 = vmax.f32 %v123, %v143
    %v188 = vmax.f32 %v124, %v145
    %v189 = vmax.f32 %v125, %v147
    %v190 = vmax.f32 %v126, %v149
    %v191 = vmax.f32 %v127, %v151
    %v192 = vmax.f32 %v128, %v153
    %v193 = vmax.f32 %v129, %v155
    %v194 = vmax.f32 %v130, %v157
    %v195 = vmax.f32 %v131, %v159
    %v196 = vmax.f32 %v132, %v161
    %v197 = vmax.f32 %v133, %v163
    %v198 = vmax.f32 %v134, %v165
    %v199 = vmax.f32 %v135, %v167
    %vm200 = vcmask 113664
    %201 = vst.msk [vmem:[#allocation2 + $0x2] sm:$0xff] %vm200, %v184
    %202 = vst.msk [vmem:[#allocation2 + $0xa] sm:$0xff] %vm200, %v185
    %203 = vst.msk [vmem:[#allocation2 + $0x1a] sm:$0xff] %vm200, %v186
    %204 = vst.msk [vmem:[#allocation2 + $0x22] sm:$0xff] %vm200, %v187
    %205 = vst.msk [vmem:[#allocation2 + $0x32] sm:$0xff] %vm200, %v188
    %206 = vst.msk [vmem:[#allocation2 + $0x3a] sm:$0xff] %vm200, %v189
    %207 = vst.msk [vmem:[#allocation2 + $0x4a] sm:$0xff] %vm200, %v190
    %208 = vst.msk [vmem:[#allocation2 + $0x52] sm:$0xff] %vm200, %v191
    %209 = vst.msk [vmem:[#allocation2 + $0x62] sm:$0xff] %vm200, %v192
    %210 = vst.msk [vmem:[#allocation2 + $0x6a] sm:$0xff] %vm200, %v193
    %211 = vst.msk [vmem:[#allocation2 + $0x7a] sm:$0xff] %vm200, %v194
    %212 = vst.msk [vmem:[#allocation2 + $0x82] sm:$0xff] %vm200, %v195
    %213 = vst.msk [vmem:[#allocation2 + $0x92] sm:$0xff] %vm200, %v196
    %214 = vst.msk [vmem:[#allocation2 + $0x9a] sm:$0xff] %vm200, %v197
    %215 = vst.msk [vmem:[#allocation2 + $0xaa] sm:$0xff] %vm200, %v198
    %216 = vst.msk [vmem:[#allocation2 + $0xb2] sm:$0xff] %vm200, %v199
    %v217 = vld [vmem:[#allocation2] sm:$0xff]
    %v218 = vld [vmem:[#allocation2 + $0x8] sm:$0xff]
    %v219 = vld [vmem:[#allocation2 + $0x18] sm:$0xff]
    %v220 = vld [vmem:[#allocation2 + $0x20] sm:$0xff]
    %v221 = vld [vmem:[#allocation2 + $0x30] sm:$0xff]
    %v222 = vld [vmem:[#allocation2 + $0x38] sm:$0xff]
    %v223 = vld [vmem:[#allocation2 + $0x48] sm:$0xff]
    %v224 = vld [vmem:[#allocation2 + $0x50] sm:$0xff]
    %v225 = vld [vmem:[#allocation2 + $0x60] sm:$0xff]
    %v226 = vld [vmem:[#allocation2 + $0x68] sm:$0xff]
    %v227 = vld [vmem:[#allocation2 + $0x78] sm:$0xff]
    %v228 = vld [vmem:[#allocation2 + $0x80] sm:$0xff]
    %v229 = vld [vmem:[#allocation2 + $0x90] sm:$0xff]
    %v230 = vld [vmem:[#allocation2 + $0x98] sm:$0xff]
    %v231 = vld [vmem:[#allocation2 + $0xa8] sm:$0xff]
    %v232 = vld [vmem:[#allocation2 + $0xb0] sm:$0xff]
    %v233 = vld [vmem:[#allocation2 + $0x2] sm:$0xff]
    %v234 = vld [vmem:[#allocation2 + $0xa] sm:$0xff]
    %v235 = vld [vmem:[#allocation2 + $0x1a] sm:$0xff]
    %v236 = vld [vmem:[#allocation2 + $0x22] sm:$0xff]
    %v237 = vld [vmem:[#allocation2 + $0x32] sm:$0xff]
    %v238 = vld [vmem:[#allocation2 + $0x3a] sm:$0xff]
    %v239 = vld [vmem:[#allocation2 + $0x4a] sm:$0xff]
    %v240 = vld [vmem:[#allocation2 + $0x52] sm:$0xff]
    %v241 = vld [vmem:[#allocation2 + $0x62] sm:$0xff]
    %v242 = vld [vmem:[#allocation2 + $0x6a] sm:$0xff]
    %v243 = vld [vmem:[#allocation2 + $0x7a] sm:$0xff]
    %v244 = vld [vmem:[#allocation2 + $0x82] sm:$0xff]
    %v245 = vld [vmem:[#allocation2 + $0x92] sm:$0xff]
    %v246 = vld [vmem:[#allocation2 + $0x9a] sm:$0xff]
    %v247 = vld [vmem:[#allocation2 + $0xaa] sm:$0xff]
    %v248 = vld [vmem:[#allocation2 + $0xb2] sm:$0xff]
    %v249 = vld [vmem:[#allocation2 + $0x4] sm:$0xff]
    %v250 = vld [vmem:[#allocation2 + $0xc] sm:$0xff]
    %v251 = vld [vmem:[#allocation2 + $0x1c] sm:$0xff]
    %v252 = vld [vmem:[#allocation2 + $0x24] sm:$0xff]
    %v253 = vld [vmem:[#allocation2 + $0x34] sm:$0xff]
    %v254 = vld [vmem:[#allocation2 + $0x3c] sm:$0xff]
    %v255 = vld [vmem:[#allocation2 + $0x4c] sm:$0xff]
    %v256 = vld [vmem:[#allocation2 + $0x54] sm:$0xff]
    %v257 = vld [vmem:[#allocation2 + $0x64] sm:$0xff]
    %v258 = vld [vmem:[#allocation2 + $0x6c] sm:$0xff]
    %v259 = vld [vmem:[#allocation2 + $0x7c] sm:$0xff]
    %v260 = vld [vmem:[#allocation2 + $0x84] sm:$0xff]
    %v261 = vld [vmem:[#allocation2 + $0x94] sm:$0xff]
    %v262 = vld [vmem:[#allocation2 + $0x9c] sm:$0xff]
    %v263 = vld [vmem:[#allocation2 + $0xac] sm:$0xff]
    %v264 = vld [vmem:[#allocation2 + $0xb4] sm:$0xff]
    %v265 = vmax.f32 %v217, %v233
    %v266 = vmax.f32 %v218, %v234
    %v267 = vmax.f32 %v219, %v235
    %v268 = vmax.f32 %v220, %v236
    %v269 = vmax.f32 %v221, %v237
    %v270 = vmax.f32 %v222, %v238
    %v271 = vmax.f32 %v223, %v239
    %v272 = vmax.f32 %v224, %v240
    %v273 = vmax.f32 %v225, %v241
    %v274 = vmax.f32 %v226, %v242
    %v275 = vmax.f32 %v227, %v243
    %v276 = vmax.f32 %v228, %v244
    %v277 = vmax.f32 %v229, %v245
    %v278 = vmax.f32 %v230, %v246
    %v279 = vmax.f32 %v231, %v247
    %v280 = vmax.f32 %v232, %v248
    %v281 = vmax.f32 %v265, %v249
    %v282 = vmax.f32 %v266, %v250
    %v283 = vmax.f32 %v267, %v251
    %v284 = vmax.f32 %v268, %v252
    %v285 = vmax.f32 %v269, %v253
    %v286 = vmax.f32 %v270, %v254
    %v287 = vmax.f32 %v271, %v255
    %v288 = vmax.f32 %v272, %v256
    %v289 = vmax.f32 %v273, %v257
    %v290 = vmax.f32 %v274, %v258
    %v291 = vmax.f32 %v275, %v259
    %v292 = vmax.f32 %v276, %v260
    %v293 = vmax.f32 %v277, %v261
    %v294 = vmax.f32 %v278, %v262
    %v295 = vmax.f32 %v279, %v263
    %v296 = vmax.f32 %v280, %v264
    %v297 = vcombine.low %v281, %v285
    %v298 = vcombine.high %v281, %v285
    %v300 = vunpack.c.l.s4 1983009808
    %v301 = vunpack.c.0.s8 %v300
    %v302 = vlaneseq
    %v303 = vshrl.u32 %v302, 7
    %v304 = vsub.s32 %v301, %v303
    %v305 = vrot.slane %v297, %v304
    %v307 = vunpack.c.l.s4 1983009808
    %v308 = vunpack.c.0.s8 %v307
    %v309 = vlaneseq
    %v310 = vshrl.u32 %v309, 7
    %v311 = vsub.s32 %v308, %v310
    %v312 = vrot.slane %v298, %v311
    %v313 = vcombine.low %v283, %v287
    %v314 = vcombine.high %v283, %v287
    %v316 = vunpack.c.l.s4 1983009808
    %v317 = vunpack.c.0.s8 %v316
    %v318 = vlaneseq
    %v319 = vshrl.u32 %v318, 7
    %v320 = vsub.s32 %v317, %v319
    %v321 = vrot.slane %v313, %v320
    %v323 = vunpack.c.l.s4 1983009808
    %v324 = vunpack.c.0.s8 %v323
    %v325 = vlaneseq
    %v326 = vshrl.u32 %v325, 7
    %v327 = vsub.s32 %v324, %v326
    %v328 = vrot.slane %v314, %v327
    %v329 = vcombine.low %v289, %v293
    %v330 = vcombine.high %v289, %v293
    %v332 = vunpack.c.l.s4 1983009808
    %v333 = vunpack.c.0.s8 %v332
    %v334 = vlaneseq
    %v335 = vshrl.u32 %v334, 7
    %v336 = vsub.s32 %v333, %v335
    %v337 = vrot.slane %v329, %v336
    %v339 = vunpack.c.l.s4 1983009808
    %v340 = vunpack.c.0.s8 %v339
    %v341 = vlaneseq
    %v342 = vshrl.u32 %v341, 7
    %v343 = vsub.s32 %v340, %v342
    %v344 = vrot.slane %v330, %v343
    %v345 = vcombine.low %v291, %v295
    %v346 = vcombine.high %v291, %v295
    %v348 = vunpack.c.l.s4 1983009808
    %v349 = vunpack.c.0.s8 %v348
    %v350 = vlaneseq
    %v351 = vshrl.u32 %v350, 7
    %v352 = vsub.s32 %v349, %v351
    %v353 = vrot.slane %v345, %v352
    %v355 = vunpack.c.l.s4 1983009808
    %v356 = vunpack.c.0.s8 %v355
    %v357 = vlaneseq
    %v358 = vshrl.u32 %v357, 7
    %v359 = vsub.s32 %v356, %v358
    %v360 = vrot.slane %v346, %v359
    %v361 = vcombine.low %v305, %v321
    %v362 = vcombine.high %v305, %v321
    %v364 = vunpack.c.l.s4 1934713408
    %v365 = vunpack.c.0.s8 %v364
    %v366 = vlaneseq
    %v367 = vshrl.u32 %v366, 7
    %v368 = vsub.s32 %v365, %v367
    %v369 = vrot.slane %v361, %v368
    %v371 = vunpack.c.l.s4 1934713408
    %v372 = vunpack.c.0.s8 %v371
    %v373 = vlaneseq
    %v374 = vshrl.u32 %v373, 7
    %v375 = vsub.s32 %v372, %v374
    %v376 = vrot.slane %v362, %v375
    %v377 = vcombine.low %v312, %v328
    %v378 = vcombine.high %v312, %v328
    %v380 = vunpack.c.l.s4 1934713408
    %v381 = vunpack.c.0.s8 %v380
    %v382 = vlaneseq
    %v383 = vshrl.u32 %v382, 7
    %v384 = vsub.s32 %v381, %v383
    %v385 = vrot.slane %v377, %v384
    %v387 = vunpack.c.l.s4 1934713408
    %v388 = vunpack.c.0.s8 %v387
    %v389 = vlaneseq
    %v390 = vshrl.u32 %v389, 7
    %v391 = vsub.s32 %v388, %v390
    %v392 = vrot.slane %v378, %v391
    %v393 = vcombine.low %v337, %v353
    %v394 = vcombine.high %v337, %v353
    %v396 = vunpack.c.l.s4 1934713408
    %v397 = vunpack.c.0.s8 %v396
    %v398 = vlaneseq
    %v399 = vshrl.u32 %v398, 7
    %v400 = vsub.s32 %v397, %v399
    %v401 = vrot.slane %v393, %v400
    %v403 = vunpack.c.l.s4 1934713408
    %v404 = vunpack.c.0.s8 %v403
    %v405 = vlaneseq
    %v406 = vshrl.u32 %v405, 7
    %v407 = vsub.s32 %v404, %v406
    %v408 = vrot.slane %v394, %v407
    %v409 = vcombine.low %v344, %v360
    %v410 = vcombine.high %v344, %v360
    %v412 = vunpack.c.l.s4 1934713408
    %v413 = vunpack.c.0.s8 %v412
    %v414 = vlaneseq
    %v415 = vshrl.u32 %v414, 7
    %v416 = vsub.s32 %v413, %v415
    %v417 = vrot.slane %v409, %v416
    %v419 = vunpack.c.l.s4 1934713408
    %v420 = vunpack.c.0.s8 %v419
    %v421 = vlaneseq
    %v422 = vshrl.u32 %v421, 7
    %v423 = vsub.s32 %v420, %v422
    %v424 = vrot.slane %v410, %v423
    %v425 = vcombine.low %v369, %v401
    %v426 = vcombine.high %v369, %v401
    %v427 = vcombine.low %v376, %v408
    %v428 = vcombine.high %v376, %v408
    %v429 = vcombine.low %v385, %v417
    %v430 = vcombine.high %v385, %v417
    %v431 = vcombine.low %v392, %v424
    %v432 = vcombine.high %v392, %v424
    %v433 = vcombine.low %v282, %v286
    %v434 = vcombine.high %v282, %v286
    %v436 = vunpack.c.l.s4 1983009808
    %v437 = vunpack.c.0.s8 %v436
    %v438 = vlaneseq
    %v439 = vshrl.u32 %v438, 7
    %v440 = vsub.s32 %v437, %v439
    %v441 = vrot.slane %v433, %v440
    %v443 = vunpack.c.l.s4 1983009808
    %v444 = vunpack.c.0.s8 %v443
    %v445 = vlaneseq
    %v446 = vshrl.u32 %v445, 7
    %v447 = vsub.s32 %v444, %v446
    %v448 = vrot.slane %v434, %v447
    %v449 = vcombine.low %v284, %v288
    %v450 = vcombine.high %v284, %v288
    %v452 = vunpack.c.l.s4 1983009808
    %v453 = vunpack.c.0.s8 %v452
    %v454 = vlaneseq
    %v455 = vshrl.u32 %v454, 7
    %v456 = vsub.s32 %v453, %v455
    %v457 = vrot.slane %v449, %v456
    %v459 = vunpack.c.l.s4 1983009808
    %v460 = vunpack.c.0.s8 %v459
    %v461 = vlaneseq
    %v462 = vshrl.u32 %v461, 7
    %v463 = vsub.s32 %v460, %v462
    %v464 = vrot.slane %v450, %v463
    %v465 = vcombine.low %v290, %v294
    %v466 = vcombine.high %v290, %v294
    %v468 = vunpack.c.l.s4 1983009808
    %v469 = vunpack.c.0.s8 %v468
    %v470 = vlaneseq
    %v471 = vshrl.u32 %v470, 7
    %v472 = vsub.s32 %v469, %v471
    %v473 = vrot.slane %v465, %v472
    %v475 = vunpack.c.l.s4 1983009808
    %v476 = vunpack.c.0.s8 %v475
    %v477 = vlaneseq
    %v478 = vshrl.u32 %v477, 7
    %v479 = vsub.s32 %v476, %v478
    %v480 = vrot.slane %v466, %v479
    %v481 = vcombine.low %v292, %v296
    %v482 = vcombine.high %v292, %v296
    %v484 = vunpack.c.l.s4 1983009808
    %v485 = vunpack.c.0.s8 %v484
    %v486 = vlaneseq
    %v487 = vshrl.u32 %v486, 7
    %v488 = vsub.s32 %v485, %v487
    %v489 = vrot.slane %v481, %v488
    %v491 = vunpack.c.l.s4 1983009808
    %v492 = vunpack.c.0.s8 %v491
    %v493 = vlaneseq
    %v494 = vshrl.u32 %v493, 7
    %v495 = vsub.s32 %v492, %v494
    %v496 = vrot.slane %v482, %v495
    %v497 = vcombine.low %v441, %v457
    %v498 = vcombine.high %v441, %v457
    %v500 = vunpack.c.l.s4 1934713408
    %v501 = vunpack.c.0.s8 %v500
    %v502 = vlaneseq
    %v503 = vshrl.u32 %v502, 7
    %v504 = vsub.s32 %v501, %v503
    %v505 = vrot.slane %v497, %v504
    %v507 = vunpack.c.l.s4 1934713408
    %v508 = vunpack.c.0.s8 %v507
    %v509 = vlaneseq
    %v510 = vshrl.u32 %v509, 7
    %v511 = vsub.s32 %v508, %v510
    %v512 = vrot.slane %v498, %v511
    %v513 = vcombine.low %v448, %v464
    %v514 = vcombine.high %v448, %v464
    %v516 = vunpack.c.l.s4 1934713408
    %v517 = vunpack.c.0.s8 %v516
    %v518 = vlaneseq
    %v519 = vshrl.u32 %v518, 7
    %v520 = vsub.s32 %v517, %v519
    %v521 = vrot.slane %v513, %v520
    %v523 = vunpack.c.l.s4 1934713408
    %v524 = vunpack.c.0.s8 %v523
    %v525 = vlaneseq
    %v526 = vshrl.u32 %v525, 7
    %v527 = vsub.s32 %v524, %v526
    %v528 = vrot.slane %v514, %v527
    %v529 = vcombine.low %v473, %v489
    %v530 = vcombine.high %v473, %v489
    %v532 = vunpack.c.l.s4 1934713408
    %v533 = vunpack.c.0.s8 %v532
    %v534 = vlaneseq
    %v535 = vshrl.u32 %v534, 7
    %v536 = vsub.s32 %v533, %v535
    %v537 = vrot.slane %v529, %v536
    %v539 = vunpack.c.l.s4 1934713408
    %v540 = vunpack.c.0.s8 %v539
    %v541 = vlaneseq
    %v542 = vshrl.u32 %v541, 7
    %v543 = vsub.s32 %v540, %v542
    %v544 = vrot.slane %v530, %v543
    %v545 = vcombine.low %v480, %v496
    %v546 = vcombine.high %v480, %v496
    %v548 = vunpack.c.l.s4 1934713408
    %v549 = vunpack.c.0.s8 %v548
    %v550 = vlaneseq
    %v551 = vshrl.u32 %v550, 7
    %v552 = vsub.s32 %v549, %v551
    %v553 = vrot.slane %v545, %v552
    %v555 = vunpack.c.l.s4 1934713408
    %v556 = vunpack.c.0.s8 %v555
    %v557 = vlaneseq
    %v558 = vshrl.u32 %v557, 7
    %v559 = vsub.s32 %v556, %v558
    %v560 = vrot.slane %v546, %v559
    %v561 = vcombine.low %v505, %v537
    %v562 = vcombine.high %v505, %v537
    %v563 = vcombine.low %v512, %v544
    %v564 = vcombine.high %v512, %v544
    %v565 = vcombine.low %v521, %v553
    %v566 = vcombine.high %v521, %v553
    %v567 = vcombine.low %v528, %v560
    %v568 = vcombine.high %v528, %v560
    %570 = vrot.lane.b32.xlu0 %v426, 14
    %v571 = vpop.permute.xlu0 %570
    %574 = vrot.lane.b32.xlu0 %v427, 28
    %v575 = vpop.permute.xlu0 %574
    %578 = vrot.lane.b32.xlu0 %v428, 42
    %v579 = vpop.permute.xlu0 %578
    %582 = vrot.lane.b32.xlu0 %v429, 56
    %v583 = vpop.permute.xlu0 %582
    %586 = vrot.lane.b32.xlu0 %v430, 70
    %v587 = vpop.permute.xlu0 %586
    %590 = vrot.lane.b32.xlu0 %v431, 84
    %v591 = vpop.permute.xlu0 %590
    %594 = vrot.lane.b32.xlu0 %v432, 98
    %v595 = vpop.permute.xlu0 %594
    %598 = vrot.lane.b32.xlu0 %v561, 112
    %v599 = vpop.permute.xlu0 %598
    %602 = vrot.lane.b32.xlu0 %v562, 126
    %v603 = vpop.permute.xlu0 %602
    %606 = vrot.lane.b32.xlu0 %v563, 12
    %v607 = vpop.permute.xlu0 %606
    %610 = vrot.lane.b32.xlu0 %v564, 26
    %v611 = vpop.permute.xlu0 %610
    %614 = vrot.lane.b32.xlu0 %v565, 40
    %v615 = vpop.permute.xlu0 %614
    %618 = vrot.lane.b32.xlu0 %v566, 54
    %v619 = vpop.permute.xlu0 %618
    %622 = vrot.lane.b32.xlu0 %v567, 68
    %v623 = vpop.permute.xlu0 %622
    %626 = vrot.lane.b32.xlu0 %v568, 82
    %v627 = vpop.permute.xlu0 %626
    %v629 = vsel %vm200, %v425, %v571
    %vm630 = vcmask 228352
    %v631 = vsel %vm630, %v629, %v575
    %vm632 = vcmask 343040
    %v633 = vsel %vm632, %v631, %v579
    %vm634 = vcmask 457728
    %v635 = vsel %vm634, %v633, %v583
    %vm636 = vcmask 572416
    %v637 = vsel %vm636, %v635, %v587
    %vm638 = vcmask 687104
    %v639 = vsel %vm638, %v637, %v591
    %vm640 = vcmask 801792
    %v641 = vsel %vm640, %v639, %v595
    %vm642 = vcmask 916480
    %v643 = vsel %vm642, %v641, %v599
    %vm644 = vcmask 1031168
    %v645 = vsel %vm644, %v643, %v603
    %vm646 = vcmask 97280
    %v647 = vsel %vm646, %v603, %v607
    %vm648 = vcmask 211968
    %v649 = vsel %vm648, %v647, %v611
    %vm650 = vcmask 326656
    %v651 = vsel %vm650, %v649, %v615
    %vm652 = vcmask 441344
    %v653 = vsel %vm652, %v651, %v619
    %vm654 = vcmask 556032
    %v655 = vsel %vm654, %v653, %v623
    %vm656 = vcmask 670720
    %v657 = vsel %vm656, %v655, %v627
    %658 = vst [vmem:[#allocation6] sm:$0xff] %v645
    %vm659 = vcmask 785408
    %660 = vst.msk [vmem:[#allocation6 + $0x8] sm:$0xff] %vm659, %v657
    // Predicated region
    $region10: #{tpu_custom_call.1} parent=1 // pred_check
      _
    $region11: #{tpu_custom_call.1} parent=1 // pred_check_branch
      %662 = sbr.rel (0) target = $region13
    $region12: #{tpu_custom_call.1} parent=1 // pred_region
      %s664 = ssub.s32 256, 256
      %665 = vsyncadd [#allocation5], %s664
      %s667 = sshll.u32 [#allocation6], 4
      %s668 = int_to_ptr.vmem [resolvable:$true] %s667
      %670 = dma.vmem_to_hbm [thread:$0]  %s668, 256, %s1, [#allocation5]
    $region13: #{tpu_custom_call.1} parent=1 // pred_fallthru
      _
    // Predicated region
    $region14: #{tpu_custom_call.1} parent=1 // pred_check
      _
    $region15: #{tpu_custom_call.1} parent=1 // pred_check_branch
      %672 = sbr.rel (0) target = $region17
    $region16: #{tpu_custom_call.1} parent=1 // pred_region
      %673 = dma.done [#allocation5], 256
    $region17: #{tpu_custom_call.1} parent=1 // pred_fallthru
      _
    %674 = vsyncpa [#allocation4], 1
    %675 = vsyncpa [#allocation5], 1

// kernel: tpu_custom_call.1
$region0: #{tpu_custom_call.1}
  #allocation0 [shape = 'u32[]', space=smem, size = 0x4, offset = 0x4, fixed_abs, tag = 'smem constant byte address 0x4 - core index']
  #allocation1 [shape = 'u32[144,128]{1,0:T(1,128)}', space=vmem, size = 0x12000, scoped, tag = 'internal scratch']
  #allocation2 [shape = 'f32[2,20,14]{2,1,0:T(8,128)}', space=vmem, size = 0x6000, scoped, tag = 'scratch operand']
  %s0 = inlined_call_operand.hbm [shape: f32[8,16,16], index: 0, kind: input, shape index: {}]
  %s1 = inlined_call_operand.vmem [shape: f32[8,16,14], index: 1, kind: output, shape index: {}]
  %s2 = sld [smem:[#allocation0]]
  $region41: #{tpu_custom_call.1} parent=0
    _
  %s4 = ssub.s32 1, %s2
  %s5 = scalar_select 0, %s4, %s2
  $region1: #{tpu_custom_call.1} parent=0
    #allocation3 [shape = 'u8[32768]{0}', space=vmem, size = 0x8000, scoped, tag = 'input window, operand 0']
    #allocation4 [shape = 's32[2]{0}', space=sflag, size = 0x8, scoped, tag = 'scoped memory for tpu_custom_call.1']
    %6 = vsyncpa [#allocation4], 0
    %s7 = scalar_lea.sflag [#allocation4], 1
    %8 = vsyncpa %s7, 0
    loop: start=0, step=1, limit=6
    $region2: #{tpu_custom_call.1} parent=1 // loop_pre_header
      _
    $region3: #{tpu_custom_call.1} parent=1 // loop_header
      %s10 = sphi 0, %s14
      %p11 = scmp.ge.s32.totalorder %s10, 6
      %s20 = sphi 0, %s22
      %s23 = sphi 0, %s20
      %s24 = sphi 0, %s23
      %s40 = sphi 0, %s24
      %s46 = sphi 0, %s48
      %s49 = sphi 0, %s46
      %s50 = sphi 0, %s49
      %s66 = sphi 0, %s50
    $region4: #{tpu_custom_call.1} parent=1 // loop_header_branch
      %13 = sbr.rel (%p11) target = $region8
    $region5: #{tpu_custom_call.1} parent=1 // loop_body
      %s15 = ssub.s32 %s10, 1
      %s16 = ssub.s32 %s10, 2
      %s17 = sadd.s32 %s10, 1
      %s18 = ssub.s32 %s10, %s17
      %p19 = scmp.eq.s32.totalorder %s18, 0
      %s21 = sadd.s32 %s20, 1
      %s22 = scalar_select %p19, %s20, %s21
      %p25 = pneg %p19
      %p26 = scmp.eq.s32.totalorder %s10, 3
      %p27 = por %p25, %p26
      %p28 = scmp.ne.s32.totalorder %s20, %s23
      %p29 = scmp.eq.s32.totalorder %s10, 0
      %p30 = por %p28, %p29
      %p31 = scmp.ne.s32.totalorder %s20, %s23
      %p32 = scmp.eq.s32.totalorder %s15, 3
      %p33 = por %p31, %p32
      %p34 = scmp.ne.s32.totalorder %s23, %s24
      %p35 = scmp.eq.s32.totalorder %s15, 0
      %p36 = por %p34, %p35
      %p37 = scmp.ne.s32.totalorder %s23, %s24
      %p38 = scmp.eq.s32.totalorder %s16, 3
      %p39 = por %p37, %p38
      %p41 = scmp.ne.s32.totalorder %s24, %s40
      %p42 = scmp.eq.s32.totalorder %s16, 0
      %p43 = por %p41, %p42
      %s44 = ssub.s32 %s10, %s17
      %p45 = scmp.eq.s32.totalorder %s44, 0
      %s47 = sadd.s32 %s46, 1
      %s48 = scalar_select %p45, %s46, %s47
      %p51 = pneg %p45
      %p52 = scmp.eq.s32.totalorder %s10, 3
      %p53 = por %p51, %p52
      %p54 = scmp.ne.s32.totalorder %s46, %s49
      %p55 = scmp.eq.s32.totalorder %s10, 0
      %p56 = por %p54, %p55
      %p57 = scmp.ne.s32.totalorder %s46, %s49
      %p58 = scmp.eq.s32.totalorder %s15, 3
      %p59 = por %p57, %p58
      %p60 = scmp.ne.s32.totalorder %s49, %s50
      %p61 = scmp.eq.s32.totalorder %s15, 0
      %p62 = por %p60, %p61
      %p63 = scmp.ne.s32.totalorder %s49, %s50
      %p64 = scmp.eq.s32.totalorder %s16, 3
      %p65 = por %p63, %p64
      %p67 = scmp.ne.s32.totalorder %s50, %s66
      %p68 = scmp.eq.s32.totalorder %s16, 0
      %p69 = por %p67, %p68
      %p70 = scmp.le.s32.totalorder 1, %s10
      %p71 = scmp.lt.s32.totalorder %s10, 5
      %p72 = pnand %p70, %p71
      %p73 = pneg %p72
      // Predicated region
      $region9: #{tpu_custom_call.1} parent=5 // pred_check
        _
      $region10: #{tpu_custom_call.1} parent=5 // pred_check_branch
        %75 = sbr.rel (%p72) target = $region12
      $region11: #{tpu_custom_call.1} parent=5 // pred_region
        %s76 = ssub.s32 %s10, 1
      $region12: #{tpu_custom_call.1} parent=5 // pred_fallthru
        _
      %p77 = scmp.lt.s32.totalorder %s10, 4
      // Predicated region
      $region13: #{tpu_custom_call.1} parent=5 // pred_check
        %p78 = pneg %p77
      $region14: #{tpu_custom_call.1} parent=5 // pred_check_branch
        %80 = sbr.rel (%p78) target = $region16
      $region15: #{tpu_custom_call.1} parent=5 // pred_region
        // Predicated region
        $region17: #{tpu_custom_call.1} parent=15 // pred_check
          %p81 = pneg %p30
        $region18: #{tpu_custom_call.1} parent=15 // pred_check_branch
          %83 = sbr.rel (%p81) target = $region20
        $region19: #{tpu_custom_call.1} parent=15 // pred_region
          %s84 = sand.u32 %s20, 1
          %s85 = scalar_lea.sflag [#allocation4], %s84
          %s86 = sand.u32 %s20, 1
          %s87 = smul.addr %s86, 32
          %s88 = scalar_lea.vmem [#allocation3], %s87
          %s89 = smul.u32 2, %s10
          %s91 = ssub.s32 512, 512
          %92 = vsyncadd %s85, %s91
          %s93 = smul.addr %s89, 2
          %s94 = smul.addr %s93, 128
          %s95 = scalar_lea.hbm %s0, %s94
          %s96 = sshll.u32 %s88, 4
          %s97 = int_to_ptr.vmem [resolvable:$true] %s96
          %102 = dma.hbm_to_vmem [thread:$0]  %s95, 512, %s97, %s85, 128, 128, 8
        $region20: #{tpu_custom_call.1} parent=15 // pred_fallthru
          _
      $region16: #{tpu_custom_call.1} parent=5 // pred_fallthru
        _
      %p103 = scmp.le.s32.totalorder 1, %s10
      %p104 = scmp.lt.s32.totalorder %s10, 5
      %p105 = pnand %p103, %p104
      %p106 = pneg %p105
      // Predicated region
      $region21: #{tpu_custom_call.1} parent=5 // pred_check
        _
      $region22: #{tpu_custom_call.1} parent=5 // pred_check_branch
        %108 = sbr.rel (%p105) target = $region24
      $region23: #{tpu_custom_call.1} parent=5 // pred_region
        %s109 = ssub.s32 %s10, 1
        %s110 = sand.u32 %s23, 1
        %s111 = scalar_lea.sflag [#allocation4], %s110
        %s112 = sand.u32 %s23, 1
        %s113 = smul.addr %s112, 32
        %s114 = scalar_lea.vmem [#allocation3], %s113
        // Predicated region
        $region25: #{tpu_custom_call.1} parent=23 // pred_check
          %p115 = pneg %p36
        $region26: #{tpu_custom_call.1} parent=23 // pred_check_branch
          %117 = sbr.rel (%p115) target = $region28
        $region27: #{tpu_custom_call.1} parent=23 // pred_region
          %118 = dma.done %s111, 512
        $region28: #{tpu_custom_call.1} parent=23 // pred_fallthru
          _
        %s119 = sand.u32 %s23, 1
        %s120 = scalar_lea.sflag [#allocation4], %s119
        %s121 = sand.u32 %s23, 1
        %s122 = smul.addr %s121, 32
        %s123 = scalar_lea.vmem [#allocation3], %s122
        %p124 = pneg %p36
        %p125 = pneg %p33
        %p126 = pneg %p62
        %p127 = pneg %p59
        %s128 = smul.u32 2, %s15
        %p129 = scmp.lt.s32.totalorder %s128, 7
        %s130 = scalar_select %p129, %s128, 7
        %s131 = smul.addr %s130, 2
        %s132 = smul.addr %s131, 8
        %s133 = scalar_lea.vmem %s1, %s132
        %s134 = smul.u32 2, %s15
        %s135 = smul.u32 2, %s15
        %p136 = scmp.lt.s32.totalorder %s135, 7
        %s137 = scalar_select %p136, %s135, 7
        %s138 = smul.addr %s137, 2
        %s139 = smul.addr %s138, 8
        %s140 = scalar_lea.vmem %s1, %s139
        %s141 = smul.u32 2, %s15
        %vm142 = vcmask 107520
        %143 = vst.msk [vmem:[#allocation2] sm:$0x3] %vm142, 0.0
        %144 = vst.msk [vmem:[#allocation2 + $0x18] sm:$0x3] %vm142, 0.0
        %145 = vst.msk [vmem:[#allocation2 + $0x12] sm:$0x3] %vm142, 0.0
        %146 = vst.msk [vmem:[#allocation2 + $0x2a] sm:$0x3] %vm142, 0.0
        %v147 = vld [vmem:[%s114] sm:$0xff]
        %v148 = vld [vmem:[%s114 + $0x8] sm:$0xff]
        %v149 = vld [vmem:[%s114 + $0x10] sm:$0xff]
        %v150 = vld [vmem:[%s114 + $0x18] sm:$0xff]
        %155 = vrot.lane.b32.xlu0 %v147, 127
        %v156 = vpop.permute.xlu0 %155
        %157 = vrot.lane.b32.xlu0 %v148, 127
        %v158 = vpop.permute.xlu0 %157
        %159 = vrot.lane.b32.xlu0 %v149, 127
        %v160 = vpop.permute.xlu0 %159
        %161 = vrot.lane.b32.xlu0 %v150, 127
        %v162 = vpop.permute.xlu0 %161
        %v167 = vmax.f32 %v147, %v156
        %v168 = vmax.f32 %v148, %v158
        %v169 = vmax.f32 %v149, %v160
        %v170 = vmax.f32 %v150, %v162
        %171 = vrot.lane.b32.xlu0 %v147, 126
        %v172 = vpop.permute.xlu0 %171
        %173 = vrot.lane.b32.xlu0 %v148, 126
        %v174 = vpop.permute.xlu0 %173
        %175 = vrot.lane.b32.xlu0 %v149, 126
        %v176 = vpop.permute.xlu0 %175
        %177 = vrot.lane.b32.xlu0 %v150, 126
        %v178 = vpop.permute.xlu0 %177
        %v183 = vmax.f32 %v167, %v172
        %v184 = vmax.f32 %v168, %v174
        %v185 = vmax.f32 %v169, %v176
        %v186 = vmax.f32 %v170, %v178
        %vm187 = vcmask 113664
        %188 = vst.msk [vmem:[#allocation2 + $0x2] sm:$0xff] %vm187, %v183
        %189 = vst.msk [vmem:[#allocation2 + $0xa] sm:$0xff] %vm187, %v184
        %190 = vst.msk [vmem:[#allocation2 + $0x1a] sm:$0xff] %vm187, %v185
        %191 = vst.msk [vmem:[#allocation2 + $0x22] sm:$0xff] %vm187, %v186
        %v192 = vld [vmem:[#allocation2] sm:$0xff]
        %v193 = vld [vmem:[#allocation2 + $0x8] sm:$0xff]
        %v194 = vld [vmem:[#allocation2 + $0x18] sm:$0xff]
        %v195 = vld [vmem:[#allocation2 + $0x20] sm:$0xff]
        %v196 = vld [vmem:[#allocation2 + $0x2] sm:$0xff]
        %v197 = vld [vmem:[#allocation2 + $0xa] sm:$0xff]
        %v198 = vld [vmem:[#allocation2 + $0x1a] sm:$0xff]
        %v199 = vld [vmem:[#allocation2 + $0x22] sm:$0xff]
        %v200 = vld [vmem:[#allocation2 + $0x4] sm:$0xff]
        %v201 = vld [vmem:[#allocation2 + $0xc] sm:$0xff]
        %v202 = vld [vmem:[#allocation2 + $0x1c] sm:$0xff]
        %v203 = vld [vmem:[#allocation2 + $0x24] sm:$0xff]
        %v204 = vmax.f32 %v192, %v196
        %v205 = vmax.f32 %v193, %v197
        %v206 = vmax.f32 %v194, %v198
        %v207 = vmax.f32 %v195, %v199
        %v208 = vmax.f32 %v204, %v200
        %v209 = vmax.f32 %v205, %v201
        %v210 = vmax.f32 %v206, %v202
        %v211 = vmax.f32 %v207, %v203
        %212 = vst.msk [vmem:[%s140] sm:$0xff] %vm187, %v208
        %213 = vst.msk [vmem:[%s140 + $0x8] sm:$0xff] %vm187, %v209
        %214 = vst.msk [vmem:[%s140 + $0x10] sm:$0xff] %vm187, %v210
        %215 = vst.msk [vmem:[%s140 + $0x18] sm:$0xff] %vm187, %v211
        %s216 = smul.u32 2, %s15
        %p217 = scmp.lt.s32.totalorder %s216, 7
        %s218 = scalar_select %p217, %s216, 7
        %s219 = smul.addr %s218, 2
        %s220 = smul.addr %s219, 8
        %s221 = scalar_lea.vmem %s1, %s220
        // Predicated region
        $region29: #{tpu_custom_call.1} parent=23 // pred_check
          %p222 = pneg %p59
        $region30: #{tpu_custom_call.1} parent=23 // pred_check_branch
          %224 = sbr.rel (%p222) target = $region32
        $region31: #{tpu_custom_call.1} parent=23 // pred_region
          %s225 = smul.u32 2, %s15
        $region32: #{tpu_custom_call.1} parent=23 // pred_fallthru
          _
      $region24: #{tpu_custom_call.1} parent=5 // pred_fallthru
        _
      %p226 = scmp.le.s32.totalorder 2, %s10
      // Predicated region
      $region33: #{tpu_custom_call.1} parent=5 // pred_check
        %p227 = pneg %p226
      $region34: #{tpu_custom_call.1} parent=5 // pred_check_branch
        %229 = sbr.rel (%p227) target = $region36
      $region35: #{tpu_custom_call.1} parent=5 // pred_region
        %s230 = ssub.s32 %s10, 2
        // Predicated region
        $region37: #{tpu_custom_call.1} parent=35 // pred_check
          %p231 = pneg %p65
        $region38: #{tpu_custom_call.1} parent=35 // pred_check_branch
          %233 = sbr.rel (%p231) target = $region40
        $region39: #{tpu_custom_call.1} parent=35 // pred_region
          %s234 = smul.u32 2, %s16
          %p235 = scmp.lt.s32.totalorder %s234, 7
          %s236 = scalar_select %p235, %s234, 7
          %s237 = smul.addr %s236, 2
          %s238 = smul.addr %s237, 8
          %s239 = scalar_lea.vmem %s1, %s238
        $region40: #{tpu_custom_call.1} parent=35 // pred_fallthru
          _
      $region36: #{tpu_custom_call.1} parent=5 // pred_fallthru
        _
    $region6: #{tpu_custom_call.1} parent=1 // loop_footer
      %s14 = sadd.s32 1, %s10
    $region7: #{tpu_custom_call.1} parent=1 // loop_footer_branch
      %9 = sbr.rel target = $region3
    $region8: #{tpu_custom_call.1} parent=1 // loop_exit
      _
    %240 = vsyncpa [#allocation4], 1
    %s241 = scalar_lea.sflag [#allocation4], 1
    %242 = vsyncpa %s241, 1

</llo_original>
